<compile_context>
chip_gen: v7x
topology: tpu7x:2x2x1
jax: 0.10.0
libtpu: 0.0.40
codegen_flags: <defaults>
</compile_context>

<pallas_src>
import functools

import jax
import jax.numpy as jnp
from jax.experimental import pallas as pl
from jax.experimental.pallas import tpu as pltpu


_MASK_VALUE = -jnp.finfo(jnp.float32).max   # matches torch max_neg_value(f32)
_VMEM_LIMIT = 48 * 1024 * 1024              # < 64 MiB physical on v7x, > scoped defaults


def _pick_tile(full, prefs):
    """Largest preferred tile that divides `full`, else the full extent."""
    for p in prefs:
        if full % p == 0:
            return p
    return full


# --------------------------------------------------------------------------
# Tiled matmul + fused bias (MXU, bf16 operands / f32 accumulation)
# --------------------------------------------------------------------------
def _linear_kernel(x_ref, w_ref, b_ref, o_ref, acc_ref):
    @pl.when(pl.program_id(2) == 0)
    def _():
        acc_ref[...] = jnp.zeros_like(acc_ref)

    acc_ref[...] += jnp.dot(x_ref[...].astype(jnp.bfloat16),
                            w_ref[...].astype(jnp.bfloat16),
                            preferred_element_type=jnp.float32)

    @pl.when(pl.program_id(2) == pl.num_programs(2) - 1)
    def _():
        o_ref[...] = (acc_ref[...]
                      + b_ref[...].astype(jnp.float32)).astype(o_ref.dtype)


def linear(x, w, b=None):
    """x:(M,K) @ w:(K,N) + b:(N,) with a Pallas tiled-matmul kernel."""
    M, K = x.shape
    K2, N = w.shape
    assert K == K2
    if b is None:
        b = jnp.zeros((N,), dtype=x.dtype)
    b2 = b.reshape(1, N)

    # Bigger tiles -> fewer weight/activation HBM re-reads. bf16 operands keep
    # the double-buffered footprint ~12 MiB at (1024, 512, 512).
    tm = _pick_tile(M, (1024, 512, 256, 128))
    tn = _pick_tile(N, (512, 256, 128))
    tk = _pick_tile(K, (512, 256, 128))
    grid = (M // tm, N // tn, K // tk)

    return pl.pallas_call(
        _linear_kernel,
        out_shape=jax.ShapeDtypeStruct((M, N), x.dtype),
        grid_spec=pltpu.PrefetchScalarGridSpec(
            num_scalar_prefetch=0,
            grid=grid,
            in_specs=[
                pl.BlockSpec((tm, tk), lambda i, j, k: (i, k)),
                pl.BlockSpec((tk, tn), lambda i, j, k: (k, j)),
                pl.BlockSpec((1, tn), lambda i, j, k: (0, j)),
            ],
            out_specs=pl.BlockSpec((tm, tn), lambda i, j, k: (i, j)),
            scratch_shapes=[pltpu.VMEM((tm, tn), jnp.float32)],
        ),
        compiler_params=pltpu.CompilerParams(
            dimension_semantics=("parallel", "parallel", "arbitrary"),
            vmem_limit_bytes=_VMEM_LIMIT),
    )(x, w, b2)


# --------------------------------------------------------------------------
# Flash-attention forward (online softmax, causal, bf16 MXU / f32 state)
# --------------------------------------------------------------------------
def _flash_attn_kernel(q_ref, k_ref, v_ref, o_ref, m_sc, l_sc, acc_sc, q_sc,
                       *, scale, causal, tq, tk):
    qi = pl.program_id(1)
    ki = pl.program_id(2)

    @pl.when(ki == 0)
    def _():
        m_sc[...] = jnp.full_like(m_sc, -jnp.inf)
        l_sc[...] = jnp.zeros_like(l_sc)
        acc_sc[...] = jnp.zeros_like(acc_sc)
        # Hoist q * scale out of the kv loop; fold it into the bf16 cast.
        q_sc[...] = (q_ref[...] * scale).astype(q_sc.dtype)

    def body():
        q = q_sc[...]                                   # (tq, dh) bf16, pre-scaled
        k = k_ref[...].astype(jnp.bfloat16)             # (tk, dh)
        # s = q @ k^T, contracting on dh, f32 accumulation on the MXU.
        s = jax.lax.dot_general(q, k, (((1,), (1,)), ((), ())),
                                preferred_element_type=jnp.float32)
        if causal:
            q_pos = qi * tq + jax.lax.broadcasted_iota(jnp.int32, (tq, tk), 0)
            k_pos = ki * tk + jax.lax.broadcasted_iota(jnp.int32, (tq, tk), 1)
            s = jnp.where(k_pos <= q_pos, s, _MASK_VALUE)

        m_prev = m_sc[...]
        m_new = jnp.maximum(m_prev, s.max(axis=-1, keepdims=True))
        alpha = jnp.exp(m_prev - m_new)
        p = jnp.exp(s - m_new)
        l_sc[...] = alpha * l_sc[...] + p.sum(axis=-1, keepdims=True)
        acc_sc[...] = alpha * acc_sc[...] + jnp.dot(
            p.astype(jnp.bfloat16), v_ref[...].astype(jnp.bfloat16),
            preferred_element_type=jnp.float32)
        m_sc[...] = m_new

    if causal:
        # Skip compute for kv tiles entirely above the diagonal for this q tile
        # (their DMA is already skipped via the clamped kv index_map).
        run = (ki * tk) <= (qi * tq + (tq - 1))
        pl.when(run)(body)
    else:
        body()

    @pl.when(ki == pl.num_programs(2) - 1)
    def _():
        inv_l = pl.reciprocal(l_sc[...], approx=True)   # EUP, off the VALU slots
        o_ref[...] = (acc_sc[...] * inv_l).astype(o_ref.dtype)


def flash_attention(q, k, v, *, scale, causal=True):
    """q,k,v: (B*H, S, Dh) -> (B*H, S, Dh)."""
    BH, S, Dh = q.shape
    # Large q tiles cut total K/V HBM traffic (scales as S/tq); keep the (tq,tk)
    # f32 score tile <= ~1 MiB to bound vreg pressure.
    tq = _pick_tile(S, (1024, 512, 256, 128))
    tk = _pick_tile(S, (256, 128))
    grid = (BH, S // tq, S // tk)   # kv reduction axis last

    def q_map(bh, qi, ki):
        return (bh, qi, 0)

    if causal:
        def kv_map(bh, qi, ki):
            # Clamp fully-masked kv tiles to the last valid block for this q
            # tile: the block index repeats, so the pipeline skips the DMA.
            kmax = (qi * tq + (tq - 1)) // tk
            return (bh, jnp.minimum(ki, kmax), 0)
    else:
        def kv_map(bh, qi, ki):
            return (bh, ki, 0)

    kernel = functools.partial(_flash_attn_kernel,
                               scale=scale, causal=causal, tq=tq, tk=tk)

    return pl.pallas_call(
        kernel,
        out_shape=jax.ShapeDtypeStruct((BH, S, Dh), q.dtype),
        grid_spec=pltpu.PrefetchScalarGridSpec(
            num_scalar_prefetch=0,
            grid=grid,
            in_specs=[
                pl.BlockSpec((None, tq, Dh), q_map),
                pl.BlockSpec((None, tk, Dh), kv_map),
                pl.BlockSpec((None, tk, Dh), kv_map),
            ],
            out_specs=pl.BlockSpec((None, tq, Dh), q_map),
            scratch_shapes=[
                pltpu.VMEM((tq, 1), jnp.float32),     # running max m
                pltpu.VMEM((tq, 1), jnp.float32),     # running denom l
                pltpu.VMEM((tq, Dh), jnp.float32),    # output accumulator
                pltpu.VMEM((tq, Dh), jnp.bfloat16),   # cached scaled q (bf16)
            ],
        ),
        compiler_params=pltpu.CompilerParams(
            dimension_semantics=("parallel", "parallel", "arbitrary"),
            vmem_limit_bytes=_VMEM_LIMIT),
    )(q, k, v)


# --------------------------------------------------------------------------
# Module
# --------------------------------------------------------------------------
class Attention:
    """JAX/Pallas port of the PyTorch Attention module (forward, eval mode)."""

    def __init__(self, dim, seq_len, causal=True, heads=8, dim_head=64,
                 dropout=0.0, stable=False, *, key, dtype=jnp.float32):
        inner = dim_head * heads
        self.heads = heads
        self.dim_head = dim_head
        self.seq_len = seq_len
        self.scale = dim_head ** -0.5
        self.causal = causal
        # `stable` (stable_softmax) is covered by the max-subtracting online softmax.
        # TODO(synk): dropout with p > 0 is not implemented (p=0.0 default == identity).

        k1, k2, k3 = jax.random.split(key, 3)
        bound_qkv = 1.0 / (dim ** 0.5)
        self.w_qkv = jax.random.uniform(k1, (dim, inner * 3), dtype,
                                        -bound_qkv, bound_qkv)
        bound_out = 1.0 / (inner ** 0.5)
        self.w_out = jax.random.uniform(k2, (inner, dim), dtype,
                                        -bound_out, bound_out)
        self.b_out = jax.random.uniform(k3, (dim,), dtype,
                                        -bound_out, bound_out)

    def __call__(self, x, mask=None):
        # TODO(synk): optional key-padding `mask` path not implemented (mask=None only).
        assert mask is None, "key-padding mask path not implemented"
        b, n, d = x.shape
        h, dh = self.heads, self.dim_head
        inner = h * dh

        qkv = linear(x.reshape(b * n, d), self.w_qkv)          # (b*n, 3*inner)
        # Single transpose (instead of three) to get (3, b, h, n, dh).
        qkv = qkv.reshape(b, n, 3, h, dh).transpose(2, 0, 3, 1, 4)
        q = qkv[0].reshape(b * h, n, dh)
        k = qkv[1].reshape(b * h, n, dh)
        v = qkv[2].reshape(b * h, n, dh)

        o = flash_attention(q, k, v, scale=self.scale, causal=self.causal)
        o = o.reshape(b, h, n, dh).transpose(0, 2, 1, 3).reshape(b * n, inner)

        out = linear(o, self.w_out, self.b_out)                # (b*n, dim)
        return out.reshape(b, n, d)


# --------------------------------------------------------------------------
# Reference (pure JAX) for verification
# --------------------------------------------------------------------------
def _reference_attention(x, w_qkv, w_out, b_out, heads, dim_head, scale, causal):
    b, n, d = x.shape
    qkv = x @ w_qkv
    q, k, v = jnp.split(qkv, 3, axis=-1)

    def split_heads(t):
        return t.reshape(b, n, heads, dim_head).transpose(0, 2, 1, 3)

    q, k, v = map(split_heads, (q, k, v))
    q = q * scale
    dots = jnp.einsum('bhid,bhjd->bhij', q, k)
    if causal:
        cm = jnp.triu(jnp.ones((n, n), dtype=bool), k=1)
        dots = jnp.where(cm, -jnp.finfo(dots.dtype).max, dots)
    attn = jax.nn.softmax(dots, axis=-1)
    out = jnp.einsum('bhij,bhjd->bhid', attn, v)
    out = out.transpose(0, 2, 1, 3).reshape(b, n, heads * dim_head)
    return out @ w_out + b_out


if __name__ == "__main__":
    batch, seq, dim, heads, dim_head = 2, 8, 32, 2, 16

    key = jax.random.PRNGKey(0)
    kx, kp = jax.random.split(key)
    x = jax.random.normal(kx, (batch, seq, dim), dtype=jnp.float32)

    attn = Attention(dim=dim, seq_len=seq, causal=True,
                     heads=heads, dim_head=dim_head, key=kp)

    out = jax.block_until_ready(attn(x))

    ref = _reference_attention(x, attn.w_qkv, attn.w_out, attn.b_out,
                               heads, dim_head, attn.scale, True)
    assert out.shape == (batch, seq, dim)
    # bf16 MXU operands + approx reciprocal -> looser tolerance than pure-f32.
    assert jnp.allclose(out, ref, atol=2e-2, rtol=2e-2), float(jnp.abs(out - ref).max())

    print("KERNEL_OK")
</pallas_src>

<mosaic_0001>
module attributes {stable_mosaic.version = 11 : i64} {
  func.func @_linear_kernel(%arg0: i32, %arg1: i32, %arg2: i32, %arg3: memref<16x32xf32, #tpu.memory_space<vmem>>, %arg4: memref<32x96xf32, #tpu.memory_space<vmem>>, %arg5: memref<1x96xf32, #tpu.memory_space<vmem>>, %arg6: memref<16x96xf32, #tpu.memory_space<vmem>>, %arg7: memref<16x96xf32, #tpu.memory_space<vmem>>) attributes {dimension_semantics = [#tpu.dimension_semantics<parallel>, #tpu.dimension_semantics<parallel>, #tpu.dimension_semantics<arbitrary>], iteration_bounds = array<i64: 1, 1, 1>, scalar_prefetch = 0 : i64, scratch_operands = 1 : i64, tpu.core_type = #tpu.core_type<tc>, window_params = [{transform_indices = @transform_0, window_bounds = array<i64: 16, 32>}, {transform_indices = @transform_1, window_bounds = array<i64: 32, 96>}, {transform_indices = @transform_2, window_bounds = array<i64: 1, 96>}, {transform_indices = @transform_3, window_bounds = array<i64: 16, 96>}]} {
    %c0_i32 = arith.constant 0 : i32
    %0 = arith.cmpi eq, %arg2, %c0_i32 : i32
    %1 = arith.extui %0 : i1 to i32
    %c0_i32_0 = arith.constant 0 : i32
    %2 = arith.cmpi ne, %1, %c0_i32_0 : i32
    scf.if %2 {
      %cst_10 = arith.constant 0.000000e+00 : f32
      %14 = vector.broadcast %cst_10 : f32 to vector<16x96xf32>
      %c0_11 = arith.constant 0 : index
      %c0_12 = arith.constant 0 : index
      %15 = vector.load %arg7[%c0_11, %c0_12] : memref<16x96xf32, #tpu.memory_space<vmem>>, vector<16x96xf32>
      tpu.vector_store %arg7[%c0_11, %c0_12], %14 {strides = array<i32>} : memref<16x96xf32, #tpu.memory_space<vmem>>, vector<16x96xf32>,
    } else {
    }
    %c0 = arith.constant 0 : index
    %c0_1 = arith.constant 0 : index
    %3 = vector.load %arg7[%c0, %c0_1] : memref<16x96xf32, #tpu.memory_space<vmem>>, vector<16x96xf32>
    %c0_2 = arith.constant 0 : index
    %c0_3 = arith.constant 0 : index
    %4 = vector.load %arg3[%c0_2, %c0_3] : memref<16x32xf32, #tpu.memory_space<vmem>>, vector<16x32xf32>
    %5 = arith.truncf %4 : vector<16x32xf32> to vector<16x32xbf16>
    %c0_4 = arith.constant 0 : index
    %c0_5 = arith.constant 0 : index
    %6 = vector.load %arg4[%c0_4, %c0_5] : memref<32x96xf32, #tpu.memory_space<vmem>>, vector<32x96xf32>
    %7 = arith.truncf %6 : vector<32x96xf32> to vector<32x96xbf16>
    %cst = arith.constant dense<0.000000e+00> : vector<16x96xf32>
    %8 = tpu.matmul %5, %7, %cst {dimension_numbers = #tpu.dot_dimension_numbers<[1], [0], [0], [1], [0, 0, 1, 1], [], []>} : vector<16x32xbf16>, vector<32x96xbf16>, vector<16x96xf32> -> vector<16x96xf32>
    %9 = arith.addf %3, %8 : vector<16x96xf32>
    %c0_6 = arith.constant 0 : index
    %c0_7 = arith.constant 0 : index
    %10 = vector.load %arg7[%c0_6, %c0_7] : memref<16x96xf32, #tpu.memory_space<vmem>>, vector<16x96xf32>
    tpu.vector_store %arg7[%c0_6, %c0_7], %9 {strides = array<i32>} : memref<16x96xf32, #tpu.memory_space<vmem>>, vector<16x96xf32>,
    %c0_i32_8 = arith.constant 0 : i32
    %11 = arith.cmpi eq, %arg2, %c0_i32_8 : i32
    %12 = arith.extui %11 : i1 to i32
    %c0_i32_9 = arith.constant 0 : i32
    %13 = arith.cmpi ne, %12, %c0_i32_9 : i32
    scf.if %13 {
      %c0_10 = arith.constant 0 : index
      %c0_11 = arith.constant 0 : index
      %14 = vector.load %arg7[%c0_10, %c0_11] : memref<16x96xf32, #tpu.memory_space<vmem>>, vector<16x96xf32>
      %c0_12 = arith.constant 0 : index
      %c0_13 = arith.constant 0 : index
      %15 = vector.load %arg5[%c0_12, %c0_13] : memref<1x96xf32, #tpu.memory_space<vmem>>, vector<1x96xf32>
      %16 = vector.broadcast %15 : vector<1x96xf32> to vector<16x96xf32>
      %17 = arith.addf %14, %16 : vector<16x96xf32>
      %c0_14 = arith.constant 0 : index
      %c0_15 = arith.constant 0 : index
      %18 = vector.load %arg6[%c0_14, %c0_15] : memref<16x96xf32, #tpu.memory_space<vmem>>, vector<16x96xf32>
      tpu.vector_store %arg6[%c0_14, %c0_15], %17 {strides = array<i32>} : memref<16x96xf32, #tpu.memory_space<vmem>>, vector<16x96xf32>,
    } else {
    }
    return
  }
  func.func @transform_0(%arg0: i32, %arg1: i32, %arg2: i32) -> (i32, i32) {
    %c0_i32 = arith.constant 0 : i32
    return %arg0, %arg2 : i32, i32
  }
  func.func @transform_1(%arg0: i32, %arg1: i32, %arg2: i32) -> (i32, i32) {
    %c0_i32 = arith.constant 0 : i32
    return %arg2, %arg1 : i32, i32
  }
  func.func @transform_2(%arg0: i32, %arg1: i32, %arg2: i32) -> (i32, i32) {
    %c0_i32 = arith.constant 0 : i32
    %c0_i32_0 = arith.constant 0 : i32
    return %c0_i32, %arg1 : i32, i32
  }
  func.func @transform_3(%arg0: i32, %arg1: i32, %arg2: i32) -> (i32, i32) {
    %c0_i32 = arith.constant 0 : i32
    return %arg0, %arg1 : i32, i32
  }
}

</mosaic_0001>

<llo_original>
// kernel: tpu_custom_call.1
$region0: #{tpu_custom_call.1}
  #allocation0 [shape = 'u32[]', space=smem, size = 0x4, offset = 0x4, fixed_abs, tag = 'smem constant byte address 0x4 - core index']
  #allocation1 [shape = 'u32[144,128]{1,0:T(1,128)}', space=vmem, size = 0x12000, scoped, tag = 'internal scratch']
  #allocation2 [shape = 'f32[16,96]{1,0:T(8,128)}', space=vmem, size = 0x2000, scoped, tag = 'scratch operand']
  %s0 = inlined_call_operand.hbm [shape: f32[16,32], index: 0, kind: input, shape index: {}]
  %s1 = inlined_call_operand.hbm [shape: f32[32,96], index: 1, kind: input, shape index: {}]
  %s2 = inlined_call_operand.vmem [shape: f32[1,96], index: 2, kind: input, shape index: {}]
  %s3 = inlined_call_operand.hbm [shape: f32[16,96], index: 3, kind: output, shape index: {}]
  %s4 = sld [smem:[#allocation0]]
  $region38: #{tpu_custom_call.1} parent=0
    _
  %s6 = ssub.s32 1, %s4
  %s7 = scalar_select 0, %s6, %s4
  $region1: #{tpu_custom_call.1} parent=0
    #allocation3 [shape = 'u8[8192]{0}', space=vmem, size = 0x2000, scoped, tag = 'input window, operand 0, single buffered']
    #allocation4 [shape = 's32[1]{0}', space=sflag, size = 0x4, scoped, tag = 'scoped memory for tpu_custom_call.1']
    #allocation5 [shape = 's32[1]{0}', space=sflag, size = 0x4, scoped, tag = 'scoped memory for tpu_custom_call.1']
    #allocation6 [shape = 'u8[16384]{0}', space=vmem, size = 0x4000, scoped, tag = 'input window, operand 1, single buffered']
    #allocation7 [shape = 's32[1]{0}', space=sflag, size = 0x4, scoped, tag = 'scoped memory for tpu_custom_call.1']
    #allocation8 [shape = 'u8[8192]{0}', space=vmem, size = 0x2000, scoped, tag = 'output window, operand 0, single buffered']
    %8 = vsyncpa [#allocation4], 0
    %9 = vsyncpa [#allocation7], 0
    %10 = vsyncpa [#allocation5], 0
    // Predicated region
    $region2: #{tpu_custom_call.1} parent=1 // pred_check
      _
    $region3: #{tpu_custom_call.1} parent=1 // pred_check_branch
      %12 = sbr.rel (0) target = $region5
    $region4: #{tpu_custom_call.1} parent=1 // pred_region
      %s14 = ssub.s32 256, 256
      %15 = vsyncadd [#allocation4], %s14
      %s16 = sshll.u32 [#allocation3], 4
      %s17 = int_to_ptr.vmem [resolvable:$true] %s16
      %22 = dma.hbm_to_vmem [thread:$0]  %s0, 256, %s17, [#allocation4], 128, 128, 8
    $region5: #{tpu_custom_call.1} parent=1 // pred_fallthru
      _
    // Predicated region
    $region6: #{tpu_custom_call.1} parent=1 // pred_check
      _
    $region7: #{tpu_custom_call.1} parent=1 // pred_check_branch
      %24 = sbr.rel (0) target = $region9
    $region8: #{tpu_custom_call.1} parent=1 // pred_region
      %s26 = ssub.s32 512, 512
      %27 = vsyncadd [#allocation7], %s26
      %s28 = sshll.u32 [#allocation6], 4
      %s29 = int_to_ptr.vmem [resolvable:$true] %s28
      %34 = dma.hbm_to_vmem [thread:$0]  %s1, 512, %s29, [#allocation7], 128, 128, 8
    $region9: #{tpu_custom_call.1} parent=1 // pred_fallthru
      _
    // Predicated region
    $region10: #{tpu_custom_call.1} parent=1 // pred_check
      _
    $region11: #{tpu_custom_call.1} parent=1 // pred_check_branch
      %36 = sbr.rel (0) target = $region13
    $region12: #{tpu_custom_call.1} parent=1 // pred_region
      _
    $region13: #{tpu_custom_call.1} parent=1 // pred_fallthru
      _
    // Predicated region
    $region14: #{tpu_custom_call.1} parent=1 // pred_check
      _
    $region15: #{tpu_custom_call.1} parent=1 // pred_check_branch
      %38 = sbr.rel (0) target = $region17
    $region16: #{tpu_custom_call.1} parent=1 // pred_region
      %39 = dma.done [#allocation4], 256
    $region17: #{tpu_custom_call.1} parent=1 // pred_fallthru
      _
    // Predicated region
    $region18: #{tpu_custom_call.1} parent=1 // pred_check
      _
    $region19: #{tpu_custom_call.1} parent=1 // pred_check_branch
      %41 = sbr.rel (0) target = $region21
    $region20: #{tpu_custom_call.1} parent=1 // pred_region
      %42 = dma.done [#allocation7], 512
    $region21: #{tpu_custom_call.1} parent=1 // pred_fallthru
      _
    %p44 = scmp.eq.s32.totalorder 0, 0
    // Predicated region
    $region22: #{tpu_custom_call.1} parent=1 // pred_check
      %p45 = pneg %p44
    $region23: #{tpu_custom_call.1} parent=1 // pred_check_branch
      %47 = sbr.rel (%p45) target = $region25
    $region24: #{tpu_custom_call.1} parent=1 // pred_region
      %vm48 = vcmask 785408
      %49 = vst.msk [vmem:[#allocation2] sm:$0xff] %vm48, 0.0
      %50 = vst.msk [vmem:[#allocation2 + $0x8] sm:$0xff] %vm48, 0.0
    $region25: #{tpu_custom_call.1} parent=1 // pred_fallthru
      _
    %v51 = vld [vmem:[#allocation2] sm:$0xff]
    %v52 = vld [vmem:[#allocation2 + $0x8] sm:$0xff]
    %v53 = vld [vmem:[#allocation3] sm:$0xff]
    %v54 = vld [vmem:[#allocation3 + $0x8] sm:$0xff]
    %v55 = vpack.c.bf16 %v54, %v53
    %v56 = vld [vmem:[#allocation6] sm:$0xff]
    %v57 = vld [vmem:[#allocation6 + $0x8] sm:$0xff]
    %v58 = vld [vmem:[#allocation6 + $0x10] sm:$0xff]
    %v59 = vld [vmem:[#allocation6 + $0x18] sm:$0xff]
    %v60 = vpack.c.bf16 %v57, %v56
    %v61 = vpack.c.bf16 %v59, %v58
    %vm62 = vcmask 261120
    %v64 = vsel %vm62, %v55, 0
    %66 = vmatprep.subr.bf16.mxu0 0
    %67 = vmatpush1.bf16.msra.mxu0 %v60
    %68 = vmatprep.subr.bf16.mxu0 0
    %69 = vmatpush1.bf16.msra.mxu0 %v61
    %70 = vmatprep.subr.bf16.mxu0 0
    %71 = vmatpush1.bf16.msra.mxu0 0
    %72 = vmatprep.subr.bf16.mxu0 0
    %73 = vmatpush1.bf16.msra.mxu0 0
    %74 = vmatprep.subr.bf16.mxu0 0
    %75 = vmatpush1.bf16.msra.mxu0 0
    %76 = vmatprep.subr.bf16.mxu0 0
    %77 = vmatpush1.bf16.msra.mxu0 0
    %78 = vmatprep.subr.bf16.mxu0 0
    %79 = vmatpush1.bf16.msra.mxu0 0
    %80 = vmatprep.subr.bf16.mxu0 0
    %81 = vmatpush1.bf16.msra.mxu0 0
    %82 = vmatprep.subr.bf16.mxu0 0
    %83 = vmatpush1.bf16.msra.mxu0 0
    %84 = vmatprep.subr.bf16.mxu0 0
    %85 = vmatpush1.bf16.msra.mxu0 0
    %86 = vmatprep.subr.bf16.mxu0 0
    %87 = vmatpush1.bf16.msra.mxu0 0
    %88 = vmatprep.subr.bf16.mxu0 0
    %89 = vmatpush1.bf16.msra.mxu0 0
    %90 = vmatprep.subr.bf16.mxu0 0
    %91 = vmatpush1.bf16.msra.mxu0 0
    %92 = vmatprep.subr.bf16.mxu0 0
    %93 = vmatpush1.bf16.msra.mxu0 0
    %94 = vmatprep.subr.bf16.mxu0 0
    %95 = vmatpush1.bf16.msra.mxu0 0
    %96 = vmatprep.subr.bf16.mxu0 0
    %97 = vmatpush1.bf16.msra.mxu0 0
    %98 = vmatprep.mubr.bf16.mxu0 0
    %99 = vmatmul.mubr.bf16.gmra.mrb[0].mxu0 %v64
    %v100 = vpop.f32.mrb[0].mxu0
    %v101 = vadd.f32 0.0, %v100
    %v102 = vpop.f32.mrb[0].mxu0
    %v103 = vpop.f32.mrb[0].mxu0
    %v104 = vadd.f32 0.0, %v103
    %v105 = vpop.f32.mrb[0].mxu0
    %106 = vdwg.mxu0
    %v107 = vadd.f32 %v51, %v101
    %v108 = vadd.f32 %v52, %v104
    %vm109 = vcmask 785408
    %110 = vst.msk [vmem:[#allocation2] sm:$0xff] %vm109, %v107
    %111 = vst.msk [vmem:[#allocation2 + $0x8] sm:$0xff] %vm109, %v108
    // Predicated region
    $region26: #{tpu_custom_call.1} parent=1 // pred_check
      %p112 = pneg %p44
    $region27: #{tpu_custom_call.1} parent=1 // pred_check_branch
      %114 = sbr.rel (%p112) target = $region29
    $region28: #{tpu_custom_call.1} parent=1 // pred_region
      %v115 = vld [vmem:[#allocation2] sm:$0xff]
      %v116 = vld [vmem:[#allocation2 + $0x8] sm:$0xff]
      %v117 = vld [vmem:[%s2] sm:$0x1]
      %v119 = vlaneseq
      %v120 = vshrl.u32 %v119, 7
      %v121 = vsub.s32 0, %v120
      %v122 = vrot.slane %v117, %v121
      %v124 = vadd.f32 %v115, %v122
      %v125 = vadd.f32 %v116, %v122
      %126 = vst.msk [vmem:[#allocation8] sm:$0xff] %vm109, %v124
      %127 = vst.msk [vmem:[#allocation8 + $0x8] sm:$0xff] %vm109, %v125
    $region29: #{tpu_custom_call.1} parent=1 // pred_fallthru
      _
    // Predicated region
    $region30: #{tpu_custom_call.1} parent=1 // pred_check
      _
    $region31: #{tpu_custom_call.1} parent=1 // pred_check_branch
      %129 = sbr.rel (0) target = $region33
    $region32: #{tpu_custom_call.1} parent=1 // pred_region
      %s131 = ssub.s32 256, 256
      %132 = vsyncadd [#allocation5], %s131
      %s133 = sshll.u32 [#allocation8], 4
      %s134 = int_to_ptr.vmem [resolvable:$true] %s133
      %139 = dma.vmem_to_hbm [thread:$0]  %s134, 256, %s3, [#allocation5], 128, 128, 8
    $region33: #{tpu_custom_call.1} parent=1 // pred_fallthru
      _
    // Predicated region
    $region34: #{tpu_custom_call.1} parent=1 // pred_check
      _
    $region35: #{tpu_custom_call.1} parent=1 // pred_check_branch
      %141 = sbr.rel (0) target = $region37
    $region36: #{tpu_custom_call.1} parent=1 // pred_region
      %142 = dma.done [#allocation5], 256
    $region37: #{tpu_custom_call.1} parent=1 // pred_fallthru
      _
    %143 = vsyncpa [#allocation4], 1
    %144 = vsyncpa [#allocation7], 1
    %145 = vsyncpa [#allocation5], 1

</llo_original>
